<compile_context>
chip_gen: v6e
topology: v6e:2x2x1
jax: 0.10.0
libtpu: 0.0.40
codegen_flags: <defaults>
</compile_context>

<pallas_src>
import functools

import numpy as np

import jax
import jax.numpy as jnp
from jax.experimental import pallas as pl
from jax.experimental.pallas import tpu as pltpu

FREQ = 1.7214206321039962
LANES = 128
PAIR_LANES = 2 * LANES   # 256: one row of the interleaved (rows, 256) view.

# Cap on rows per tile: the in-kernel f32/bf16 temporaries of the MXU
# de-interleave add several bytes/row/lane on top of the double-buffered
# blocks, so 2048 rows keeps the per-step VMEM footprint ~15-18 MiB, well
# under the 32 MiB scoped-VMEM limit on every generation.
MAX_TILE_ROWS = 2048


def _deinterleave_matrix():
    """(256, 256) 0/1 matrix: y(interleaved) @ S -> [x0 | x1] lane-dense."""
    s = np.zeros((PAIR_LANES, PAIR_LANES), np.float32)
    j = np.arange(LANES)
    s[2 * j, j] = 1.0                # even lanes (x[:, 0]) -> columns [0, 128)
    s[2 * j + 1, LANES + j] = 1.0    # odd  lanes (x[:, 1]) -> columns [128, 256)
    return s


_S_NP = _deinterleave_matrix()


def cosnet_kernel(p_ref, s_ref, x_ref, o_ref):
    # p_ref: SMEM (4,) f32 = [w1, w2, w4, c1]
    # s_ref: VMEM (256, 256) bf16 de-interleave matrix (same block every step)
    # x_ref: VMEM (TILE_R, 256) f32, lanes = [x0_0, x1_0, x0_1, x1_1, ...]
    # o_ref: VMEM (TILE_R, 128) f32
    w1 = p_ref[0]
    w2 = p_ref[1]
    w4 = p_ref[2]
    c1 = p_ref[3]

    y = x_ref[...]                                   # (TILE_R, 256) interleaved

    # Exact 3-chunk bf16 decomposition of y (f32 has 24 mantissa bits = 3 x 8),
    # so the MXU de-interleave below reconstructs the f32 values to ~2^-24
    # relative error (each matmul output column selects exactly one input lane,
    # making the per-chunk bf16 matmuls exact).
    h0 = y.astype(jnp.bfloat16)
    r1 = y - h0.astype(jnp.float32)
    h1 = r1.astype(jnp.bfloat16)
    r2 = r1 - h1.astype(jnp.float32)
    h2 = r2.astype(jnp.bfloat16)

    s = s_ref[...]
    # (TILE_R, 256) @ (256, 256) on the otherwise-idle MXU.  Row-local, so the
    # padded garbage rows of a ragged last tile cannot contaminate valid rows.
    xc = (jnp.dot(h0, s, preferred_element_type=jnp.float32)
          + jnp.dot(h1, s, preferred_element_type=jnp.float32)
          + jnp.dot(h2, s, preferred_element_type=jnp.float32))
    x0 = xc[:, :LANES]    # (TILE_R, 128) lane-dense x[:, 0]
    x1 = xc[:, LANES:]    # (TILE_R, 128) lane-dense x[:, 1]

    o_ref[...] = w1 + w2 * jnp.cos(FREQ * (x0 - w4)) + c1 * x1


def cosnet_forward(params, x, *, tile_rows=MAX_TILE_ROWS):
    """params: (4,) f32 = [w1, w2, w4, c1]; x: (N, 2) f32 -> (N,) f32."""
    n = x.shape[0]
    assert x.shape[1] == 2
    # TODO(synk): arbitrary N would need a padded/masked tail tile; the
    # synthetic spec keeps N a multiple of 128.
    assert n % LANES == 0, "N must be a multiple of 128 for this synthetic kernel"
    rows = n // LANES

    # Free row-major reshape (no HBM transpose pass): both feature columns stay
    # interleaved along lanes; the kernel de-interleaves on-chip.
    y = x.reshape(rows, PAIR_LANES)

    # Tile sizing: multi-MiB steps to amortize the fixed per-step overhead, but
    # aim for >= ~4 grid steps so input DMA / compute / writeback overlap and
    # the "parallel" axis can shard across both v7x TensorCores.
    auto = max(8, (pl.cdiv(rows, 4) + 7) // 8 * 8)
    tr = max(1, min(tile_rows, MAX_TILE_ROWS, auto, rows))
    grid = (pl.cdiv(rows, tr),)

    s = jnp.asarray(_S_NP, dtype=jnp.bfloat16)

    out2d = pl.pallas_call(
        cosnet_kernel,
        out_shape=jax.ShapeDtypeStruct((rows, LANES), jnp.float32),
        grid=grid,
        in_specs=[
            pl.BlockSpec(memory_space=pltpu.SMEM),                      # params (4,)
            pl.BlockSpec((PAIR_LANES, PAIR_LANES), lambda i: (0, 0)),   # S (resident)
            pl.BlockSpec((tr, PAIR_LANES), lambda i: (i, 0)),           # x tile
        ],
        out_specs=pl.BlockSpec((tr, LANES), lambda i: (i, 0)),
        compiler_params=pltpu.CompilerParams(
            dimension_semantics=("parallel",),
            vmem_limit_bytes=32 * 1024 * 1024,
        ),
        cost_estimate=pl.CostEstimate(
            # 3 bf16 chunk-matmuls (256x256 per 128 outputs) + elementwise work;
            # traffic is 8N in + 4N out (transpose pass eliminated).
            flops=3080 * n, transcendentals=n, bytes_accessed=12 * n),
    )(params, s, y)

    return out2d.reshape(n)


def cosnet_reference(params, x):
    w1, w2, w4, c1 = params
    return w1 + w2 * jnp.cos(FREQ * (x[:, 0] - w4)) + c1 * x[:, 1]


if __name__ == "__main__":
    key = jax.random.PRNGKey(0)
    k_params, k_x = jax.random.split(key)

    # Deterministic "randn"-style scalar params: [w1, w2, w4, c1].
    params = jax.random.normal(k_params, (4,), dtype=jnp.float32)

    fwd = jax.jit(cosnet_forward)

    # Case 1: N=4096 -> rows=32, auto tile = 8 rows -> 4-step pipelined grid.
    x_a = jax.random.normal(k_x, (4096, 2), dtype=jnp.float32)
    out_a = jax.block_until_ready(fwd(params, x_a))
    ref_a = cosnet_reference(params, x_a)
    assert out_a.shape == (4096,)
    assert jnp.allclose(out_a, ref_a, atol=1e-5, rtol=1e-5), "mismatch vs reference (case 1)"

    # Case 2: N=4608 -> rows=36, tile = 16 rows -> ragged (masked) last block.
    x_b = jax.random.normal(jax.random.PRNGKey(1), (4608, 2), dtype=jnp.float32)
    out_b = jax.block_until_ready(fwd(params, x_b))
    ref_b = cosnet_reference(params, x_b)
    assert out_b.shape == (4608,)
    assert jnp.allclose(out_b, ref_b, atol=1e-5, rtol=1e-5), "mismatch vs reference (case 2)"

    print("KERNEL_OK")
</pallas_src>

<mosaic_0001>
module attributes {stable_mosaic.version = 11 : i64} {
  func.func @cosnet_kernel(%arg0: i32, %arg1: memref<4xf32, #tpu.memory_space<smem>>, %arg2: memref<256x256xbf16, #tpu.memory_space<vmem>>, %arg3: memref<8x256xf32, #tpu.memory_space<vmem>>, %arg4: memref<8x128xf32, #tpu.memory_space<vmem>>) attributes {dimension_semantics = [#tpu.dimension_semantics<parallel>], iteration_bounds = array<i64: 4>, scalar_prefetch = 0 : i64, scratch_operands = 0 : i64, tpu.core_type = #tpu.core_type<tc>, window_params = [{transform_indices = @transform_0, window_bounds = array<i64: 4>}, {pipeline_mode = #tpu.pipeline_mode<synchronous>, transform_indices = @transform_1, window_bounds = array<i64: 256, 256>}, {transform_indices = @transform_2, window_bounds = array<i64: 8, 256>}, {transform_indices = @transform_3, window_bounds = array<i64: 8, 128>}]} {
    %c0 = arith.constant 0 : index
    %0 = memref.load %arg1[%c0] : memref<4xf32, #tpu.memory_space<smem>>
    %c1 = arith.constant 1 : index
    %1 = memref.load %arg1[%c1] : memref<4xf32, #tpu.memory_space<smem>>
    %c2 = arith.constant 2 : index
    %2 = memref.load %arg1[%c2] : memref<4xf32, #tpu.memory_space<smem>>
    %c3 = arith.constant 3 : index
    %3 = memref.load %arg1[%c3] : memref<4xf32, #tpu.memory_space<smem>>
    %c0_0 = arith.constant 0 : index
    %c0_1 = arith.constant 0 : index
    %4 = vector.load %arg3[%c0_0, %c0_1] : memref<8x256xf32, #tpu.memory_space<vmem>>, vector<8x256xf32>
    %5 = arith.truncf %4 : vector<8x256xf32> to vector<8x256xbf16>
    %6 = arith.extf %5 : vector<8x256xbf16> to vector<8x256xf32>
    %7 = arith.subf %4, %6 : vector<8x256xf32>
    %8 = arith.truncf %7 : vector<8x256xf32> to vector<8x256xbf16>
    %9 = arith.extf %8 : vector<8x256xbf16> to vector<8x256xf32>
    %10 = arith.subf %7, %9 : vector<8x256xf32>
    %11 = arith.truncf %10 : vector<8x256xf32> to vector<8x256xbf16>
    %c0_2 = arith.constant 0 : index
    %c0_3 = arith.constant 0 : index
    %12 = vector.load %arg2[%c0_2, %c0_3] : memref<256x256xbf16, #tpu.memory_space<vmem>>, vector<256x256xbf16>
    %cst = arith.constant dense<0.000000e+00> : vector<8x256xf32>
    %13 = tpu.matmul %5, %12, %cst {dimension_numbers = #tpu.dot_dimension_numbers<[1], [0], [0], [1], [0, 0, 1, 1], [], []>} : vector<8x256xbf16>, vector<256x256xbf16>, vector<8x256xf32> -> vector<8x256xf32>
    %cst_4 = arith.constant dense<0.000000e+00> : vector<8x256xf32>
    %14 = tpu.matmul %8, %12, %cst_4 {dimension_numbers = #tpu.dot_dimension_numbers<[1], [0], [0], [1], [0, 0, 1, 1], [], []>} : vector<8x256xbf16>, vector<256x256xbf16>, vector<8x256xf32> -> vector<8x256xf32>
    %15 = arith.addf %13, %14 : vector<8x256xf32>
    %cst_5 = arith.constant dense<0.000000e+00> : vector<8x256xf32>
    %16 = tpu.matmul %11, %12, %cst_5 {dimension_numbers = #tpu.dot_dimension_numbers<[1], [0], [0], [1], [0, 0, 1, 1], [], []>} : vector<8x256xbf16>, vector<256x256xbf16>, vector<8x256xf32> -> vector<8x256xf32>
    %17 = arith.addf %15, %16 : vector<8x256xf32>
    %18 = vector.extract_strided_slice %17 {offsets = [0, 0], sizes = [8, 128], strides = [1, 1]} : vector<8x256xf32> to vector<8x128xf32>
    %19 = vector.extract_strided_slice %17 {offsets = [0, 128], sizes = [8, 128], strides = [1, 1]} : vector<8x256xf32> to vector<8x128xf32>
    %20 = vector.broadcast %2 : f32 to vector<8x128xf32>
    %21 = arith.subf %18, %20 : vector<8x128xf32>
    %cst_6 = arith.constant 1.72142065 : f32
    %22 = vector.broadcast %cst_6 : f32 to vector<8x128xf32>
    %23 = arith.mulf %22, %21 : vector<8x128xf32>
    %24 = math.cos %23 : vector<8x128xf32>
    %25 = vector.broadcast %1 : f32 to vector<8x128xf32>
    %26 = arith.mulf %25, %24 : vector<8x128xf32>
    %27 = vector.broadcast %0 : f32 to vector<8x128xf32>
    %28 = arith.addf %27, %26 : vector<8x128xf32>
    %29 = vector.broadcast %3 : f32 to vector<8x128xf32>
    %30 = arith.mulf %29, %19 : vector<8x128xf32>
    %31 = arith.addf %28, %30 : vector<8x128xf32>
    %c0_7 = arith.constant 0 : index
    %c0_8 = arith.constant 0 : index
    %32 = vector.load %arg4[%c0_7, %c0_8] : memref<8x128xf32, #tpu.memory_space<vmem>>, vector<8x128xf32>
    tpu.vector_store %arg4[%c0_7, %c0_8], %31 {strides = array<i32>} : memref<8x128xf32, #tpu.memory_space<vmem>>, vector<8x128xf32>,
    return
  }
  func.func @transform_0(%arg0: i32) -> i32 {
    %c0_i32 = arith.constant 0 : i32
    %c0_i32_0 = arith.constant 0 : i32
    return %c0_i32 : i32
  }
  func.func @transform_1(%arg0: i32) -> (i32, i32) {
    %c0_i32 = arith.constant 0 : i32
    %c0_i32_0 = arith.constant 0 : i32
    %c0_i32_1 = arith.constant 0 : i32
    return %c0_i32, %c0_i32_0 : i32, i32
  }
  func.func @transform_2(%arg0: i32) -> (i32, i32) {
    %c0_i32 = arith.constant 0 : i32
    %c0_i32_0 = arith.constant 0 : i32
    return %arg0, %c0_i32 : i32, i32
  }
  func.func @transform_3(%arg0: i32) -> (i32, i32) {
    %c0_i32 = arith.constant 0 : i32
    %c0_i32_0 = arith.constant 0 : i32
    return %arg0, %c0_i32 : i32, i32
  }
}

</mosaic_0001>

<llo_original>
// kernel: cosnet_forward.1
$region0: #{cosnet_forward.1}
  #allocation0 [shape = 'u32[]', space=smem, size = 0x4, offset = 0x4, fixed_abs, tag = 'smem constant byte address 0x4 - core index']
  #allocation1 [shape = 'u32[144,128]{1,0:T(1,128)}', space=vmem, size = 0x12000, scoped, tag = 'internal scratch']
  %s0 = inlined_call_operand.vmem [shape: f32[4], index: 0, kind: input, shape index: {}]
  %s1 = inlined_call_operand.vmem [shape: bf16[256,256], index: 1, kind: input, shape index: {}]
  %s2 = inlined_call_operand.vmem [shape: f32[32,256], index: 2, kind: input, shape index: {}]
  %s3 = inlined_call_operand.hbm [shape: f32[32,128], index: 3, kind: output, shape index: {}]
  %s4 = sld [smem:[#allocation0]]
  $region49: #{cosnet_forward.1} parent=0
    _
  %s6 = ssub.s32 1, %s4
  %s7 = scalar_select 0, %s6, %s4
  $region1: #{cosnet_forward.1} parent=0
    #allocation2 [shape = 'u8[512]{0}', space=smem, size = 0x200, scoped, tag = 'input window, operand 0, single buffered']
    #allocation3 [shape = 's32[2]{0}', space=sflag, size = 0x8, scoped, tag = 'scoped memory for cosnet_forward.1']
    #allocation4 [shape = 's32[2]{0}', space=sflag, size = 0x8, scoped, tag = 'scoped memory for cosnet_forward.1']
    #allocation5 [shape = 'u8[8192]{0}', space=vmem, size = 0x2000, scoped, tag = 'output window, operand 0']
    %8 = vsyncpa [#allocation4], 0
    %9 = vsyncpa [#allocation3], 0
    %s10 = scalar_lea.sflag [#allocation3], 1
    %11 = vsyncpa %s10, 0
    loop: start=0, step=1, limit=6
    $region2: #{cosnet_forward.1} parent=1 // loop_pre_header
      _
    $region3: #{cosnet_forward.1} parent=1 // loop_header
      %s13 = sphi 0, %s17
      %p14 = scmp.ge.s32.totalorder %s13, 6
      %s21 = sphi 0, %s21
      %s23 = sphi 0, %s21
      %s24 = sphi 0, %s23
      %s38 = sphi 0, %s24
      %s42 = sphi 0, %s42
      %s44 = sphi 0, %s42
      %s45 = sphi 0, %s44
      %s59 = sphi 0, %s45
      %s65 = sphi 0, %s67
      %s68 = sphi 0, %s65
      %s69 = sphi 0, %s68
      %s85 = sphi 0, %s69
      %s91 = sphi 0, %s93
      %s94 = sphi 0, %s91
      %s95 = sphi 0, %s94
      %s111 = sphi 0, %s95
    $region4: #{cosnet_forward.1} parent=1 // loop_header_branch
      %16 = sbr.rel (%p14) target = $region8
    $region5: #{cosnet_forward.1} parent=1 // loop_body
      %s18 = ssub.s32 %s13, 1
      %s19 = ssub.s32 %s13, 2
      %s20 = sadd.s32 %s13, 1
      %s22 = sadd.s32 %s21, 1
      %p25 = scmp.eq.s32.totalorder %s13, 3
      %p26 = scmp.ne.s32.totalorder %s21, %s23
      %p27 = scmp.eq.s32.totalorder %s13, 0
      %p28 = por %p26, %p27
      %p29 = scmp.ne.s32.totalorder %s21, %s23
      %p30 = scmp.eq.s32.totalorder %s18, 3
      %p31 = por %p29, %p30
      %p32 = scmp.ne.s32.totalorder %s23, %s24
      %p33 = scmp.eq.s32.totalorder %s18, 0
      %p34 = por %p32, %p33
      %p35 = scmp.ne.s32.totalorder %s23, %s24
      %p36 = scmp.eq.s32.totalorder %s19, 3
      %p37 = por %p35, %p36
      %p39 = scmp.ne.s32.totalorder %s24, %s38
      %p40 = scmp.eq.s32.totalorder %s19, 0
      %p41 = por %p39, %p40
      %s43 = sadd.s32 %s42, 1
      %p46 = scmp.eq.s32.totalorder %s13, 3
      %p47 = scmp.ne.s32.totalorder %s42, %s44
      %p48 = scmp.eq.s32.totalorder %s13, 0
      %p49 = por %p47, %p48
      %p50 = scmp.ne.s32.totalorder %s42, %s44
      %p51 = scmp.eq.s32.totalorder %s18, 3
      %p52 = por %p50, %p51
      %p53 = scmp.ne.s32.totalorder %s44, %s45
      %p54 = scmp.eq.s32.totalorder %s18, 0
      %p55 = por %p53, %p54
      %p56 = scmp.ne.s32.totalorder %s44, %s45
      %p57 = scmp.eq.s32.totalorder %s19, 3
      %p58 = por %p56, %p57
      %p60 = scmp.ne.s32.totalorder %s45, %s59
      %p61 = scmp.eq.s32.totalorder %s19, 0
      %p62 = por %p60, %p61
      %s63 = ssub.s32 %s13, %s20
      %p64 = scmp.eq.s32.totalorder %s63, 0
      %s66 = sadd.s32 %s65, 1
      %s67 = scalar_select %p64, %s65, %s66
      %p70 = pneg %p64
      %p71 = scmp.eq.s32.totalorder %s13, 3
      %p72 = por %p70, %p71
      %p73 = scmp.ne.s32.totalorder %s65, %s68
      %p74 = scmp.eq.s32.totalorder %s13, 0
      %p75 = por %p73, %p74
      %p76 = scmp.ne.s32.totalorder %s65, %s68
      %p77 = scmp.eq.s32.totalorder %s18, 3
      %p78 = por %p76, %p77
      %p79 = scmp.ne.s32.totalorder %s68, %s69
      %p80 = scmp.eq.s32.totalorder %s18, 0
      %p81 = por %p79, %p80
      %p82 = scmp.ne.s32.totalorder %s68, %s69
      %p83 = scmp.eq.s32.totalorder %s19, 3
      %p84 = por %p82, %p83
      %p86 = scmp.ne.s32.totalorder %s69, %s85
      %p87 = scmp.eq.s32.totalorder %s19, 0
      %p88 = por %p86, %p87
      %s89 = ssub.s32 %s13, %s20
      %p90 = scmp.eq.s32.totalorder %s89, 0
      %s92 = sadd.s32 %s91, 1
      %s93 = scalar_select %p90, %s91, %s92
      %p96 = pneg %p90
      %p97 = scmp.eq.s32.totalorder %s13, 3
      %p98 = por %p96, %p97
      %p99 = scmp.ne.s32.totalorder %s91, %s94
      %p100 = scmp.eq.s32.totalorder %s13, 0
      %p101 = por %p99, %p100
      %p102 = scmp.ne.s32.totalorder %s91, %s94
      %p103 = scmp.eq.s32.totalorder %s18, 3
      %p104 = por %p102, %p103
      %p105 = scmp.ne.s32.totalorder %s94, %s95
      %p106 = scmp.eq.s32.totalorder %s18, 0
      %p107 = por %p105, %p106
      %p108 = scmp.ne.s32.totalorder %s94, %s95
      %p109 = scmp.eq.s32.totalorder %s19, 3
      %p110 = por %p108, %p109
      %p112 = scmp.ne.s32.totalorder %s95, %s111
      %p113 = scmp.eq.s32.totalorder %s19, 0
      %p114 = por %p112, %p113
      %p115 = scmp.le.s32.totalorder 1, %s13
      %p116 = scmp.lt.s32.totalorder %s13, 5
      %p117 = pnand %p115, %p116
      %p118 = pneg %p117
      // Predicated region
      $region9: #{cosnet_forward.1} parent=5 // pred_check
        _
      $region10: #{cosnet_forward.1} parent=5 // pred_check_branch
        %120 = sbr.rel (%p117) target = $region12
      $region11: #{cosnet_forward.1} parent=5 // pred_region
        %s121 = ssub.s32 %s13, 1
        // Predicated region
        $region13: #{cosnet_forward.1} parent=11 // pred_check
          %p122 = pneg %p34
        $region14: #{cosnet_forward.1} parent=11 // pred_check_branch
          %124 = sbr.rel (%p122) target = $region16
        $region15: #{cosnet_forward.1} parent=11 // pred_region
          %s126 = ssub.s32 16, 16
          %127 = vsyncadd [#allocation4], %s126
          %s129 = sshll.u32 %s0, 4
          %s130 = int_to_ptr.vmem [resolvable:$true] %s129
          %132 = dma.vmem_to_smem %s130, 16, [#allocation2], [#allocation4]
        $region16: #{cosnet_forward.1} parent=11 // pred_fallthru
          _
        // Predicated region
        $region17: #{cosnet_forward.1} parent=11 // pred_check
          %p133 = pneg %p55
        $region18: #{cosnet_forward.1} parent=11 // pred_check_branch
          %135 = sbr.rel (%p133) target = $region20
        $region19: #{cosnet_forward.1} parent=11 // pred_region
          _
        $region20: #{cosnet_forward.1} parent=11 // pred_fallthru
          _
      $region12: #{cosnet_forward.1} parent=5 // pred_fallthru
        _
      %p136 = scmp.lt.s32.totalorder %s13, 4
      // Predicated region
      $region21: #{cosnet_forward.1} parent=5 // pred_check
        %p137 = pneg %p136
      $region22: #{cosnet_forward.1} parent=5 // pred_check_branch
        %139 = sbr.rel (%p137) target = $region24
      $region23: #{cosnet_forward.1} parent=5 // pred_region
        // Predicated region
        $region25: #{cosnet_forward.1} parent=23 // pred_check
          %p140 = pneg %p75
        $region26: #{cosnet_forward.1} parent=23 // pred_check_branch
          %142 = sbr.rel (%p140) target = $region28
        $region27: #{cosnet_forward.1} parent=23 // pred_region
          %p143 = scmp.lt.s32.totalorder %s13, 3
          %s144 = scalar_select %p143, %s13, 3
          %s145 = smul.addr %s144, 2
          %s146 = smul.addr %s145, 8
          %s147 = scalar_lea.vmem %s2, %s146
        $region28: #{cosnet_forward.1} parent=23 // pred_fallthru
          _
      $region24: #{cosnet_forward.1} parent=5 // pred_fallthru
        _
      %p148 = scmp.le.s32.totalorder 1, %s13
      %p149 = scmp.lt.s32.totalorder %s13, 5
      %p150 = pnand %p148, %p149
      %p151 = pneg %p150
      // Predicated region
      $region29: #{cosnet_forward.1} parent=5 // pred_check
        _
      $region30: #{cosnet_forward.1} parent=5 // pred_check_branch
        %153 = sbr.rel (%p150) target = $region32
      $region31: #{cosnet_forward.1} parent=5 // pred_region
        %s154 = ssub.s32 %s13, 1
        // Predicated region
        $region33: #{cosnet_forward.1} parent=31 // pred_check
          %p155 = pneg %p34
        $region34: #{cosnet_forward.1} parent=31 // pred_check_branch
          %157 = sbr.rel (%p155) target = $region36
        $region35: #{cosnet_forward.1} parent=31 // pred_region
          %158 = dma.done [#allocation4], 16
        $region36: #{cosnet_forward.1} parent=31 // pred_fallthru
          _
        %159 = sfence
        %p160 = pneg %p34
        %p161 = pneg %p31
        %p162 = pneg %p55
        %p163 = pneg %p52
        %p164 = scmp.lt.s32.totalorder %s18, 3
        %s165 = scalar_select %p164, %s18, 3
        %s166 = smul.addr %s165, 2
        %s167 = smul.addr %s166, 8
        %s168 = scalar_lea.vmem %s2, %s167
        %p169 = pneg %p81
        %p170 = pneg %p78
        %p171 = pneg %p107
        %p172 = pneg %p104
        %s173 = sand.u32 %s94, 1
        %s174 = scalar_lea.sflag [#allocation3], %s173
        %s175 = sand.u32 %s94, 1
        %s176 = smul.addr %s175, 8
        %s177 = scalar_lea.vmem [#allocation5], %s176
        %p178 = scmp.lt.s32.totalorder %s18, 3
        %s179 = scalar_select %p178, %s18, 3
        %s180 = smul.addr %s179, 2
        %s181 = smul.addr %s180, 8
        %s182 = scalar_lea.vmem %s2, %s181
        %s183 = sld [smem:[#allocation2]]
        %s184 = sld [smem:[#allocation2 + $0x1]]
        %s185 = sld [smem:[#allocation2 + $0x2]]
        %s186 = sld [smem:[#allocation2 + $0x3]]
        %v187 = vld [vmem:[%s182] sm:$0xff]
        %v188 = vld [vmem:[%s182 + $0x8] sm:$0xff]
        %v189 = vpack.c.bf16 %v187, %v187
        %v190 = vpack.c.bf16 %v188, %v188
        %v191 = vunpack.c.l.bf16 %v189
        %v192 = vunpack.c.l.bf16 %v190
        %v193 = vsub.f32 %v187, %v191
        %v194 = vsub.f32 %v188, %v192
        %v195 = vpack.c.bf16 %v193, %v193
        %v196 = vpack.c.bf16 %v194, %v194
        %v197 = vunpack.c.l.bf16 %v195
        %v198 = vunpack.c.l.bf16 %v196
        %v199 = vsub.f32 %v193, %v197
        %v200 = vsub.f32 %v194, %v198
        %v201 = vpack.c.bf16 %v199, %v199
        %v202 = vpack.c.bf16 %v200, %v200
        %v203 = vld [vmem:[%s1] sm:$0xff]
        %v204 = vld [vmem:[%s1 + $0x8] sm:$0xff]
        %v205 = vld [vmem:[%s1 + $0x10] sm:$0xff]
        %v206 = vld [vmem:[%s1 + $0x18] sm:$0xff]
        %v207 = vld [vmem:[%s1 + $0x20] sm:$0xff]
        %v208 = vld [vmem:[%s1 + $0x28] sm:$0xff]
        %v209 = vld [vmem:[%s1 + $0x30] sm:$0xff]
        %v210 = vld [vmem:[%s1 + $0x38] sm:$0xff]
        %v211 = vld [vmem:[%s1 + $0x40] sm:$0xff]
        %v212 = vld [vmem:[%s1 + $0x48] sm:$0xff]
        %v213 = vld [vmem:[%s1 + $0x50] sm:$0xff]
        %v214 = vld [vmem:[%s1 + $0x58] sm:$0xff]
        %v215 = vld [vmem:[%s1 + $0x60] sm:$0xff]
        %v216 = vld [vmem:[%s1 + $0x68] sm:$0xff]
        %v217 = vld [vmem:[%s1 + $0x70] sm:$0xff]
        %v218 = vld [vmem:[%s1 + $0x78] sm:$0xff]
        %v219 = vld [vmem:[%s1 + $0x80] sm:$0xff]
        %v220 = vld [vmem:[%s1 + $0x88] sm:$0xff]
        %v221 = vld [vmem:[%s1 + $0x90] sm:$0xff]
        %v222 = vld [vmem:[%s1 + $0x98] sm:$0xff]
        %v223 = vld [vmem:[%s1 + $0xa0] sm:$0xff]
        %v224 = vld [vmem:[%s1 + $0xa8] sm:$0xff]
        %v225 = vld [vmem:[%s1 + $0xb0] sm:$0xff]
        %v226 = vld [vmem:[%s1 + $0xb8] sm:$0xff]
        %v227 = vld [vmem:[%s1 + $0xc0] sm:$0xff]
        %v228 = vld [vmem:[%s1 + $0xc8] sm:$0xff]
        %v229 = vld [vmem:[%s1 + $0xd0] sm:$0xff]
        %v230 = vld [vmem:[%s1 + $0xd8] sm:$0xff]
        %v231 = vld [vmem:[%s1 + $0xe0] sm:$0xff]
        %v232 = vld [vmem:[%s1 + $0xe8] sm:$0xff]
        %v233 = vld [vmem:[%s1 + $0xf0] sm:$0xff]
        %v234 = vld [vmem:[%s1 + $0xf8] sm:$0xff]
        %v267 = vunpack.c.l.b16 %v203
        %v268 = vunpack.c.h.b16 %v203
        %v269 = vunpack.c.l.b16 %v204
        %v270 = vunpack.c.h.b16 %v204
        %v271 = vunpack.c.l.b16 %v205
        %v272 = vunpack.c.h.b16 %v205
        %v273 = vunpack.c.l.b16 %v206
        %v274 = vunpack.c.h.b16 %v206
        %v275 = vunpack.c.l.b16 %v207
        %v276 = vunpack.c.h.b16 %v207
        %v277 = vunpack.c.l.b16 %v208
        %v278 = vunpack.c.h.b16 %v208
        %v279 = vunpack.c.l.b16 %v209
        %v280 = vunpack.c.h.b16 %v209
        %v281 = vunpack.c.l.b16 %v210
        %v282 = vunpack.c.h.b16 %v210
        %v283 = vunpack.c.l.b16 %v211
        %v284 = vunpack.c.h.b16 %v211
        %v285 = vunpack.c.l.b16 %v212
        %v286 = vunpack.c.h.b16 %v212
        %v287 = vunpack.c.l.b16 %v213
        %v288 = vunpack.c.h.b16 %v213
        %v289 = vunpack.c.l.b16 %v214
        %v290 = vunpack.c.h.b16 %v214
        %v291 = vunpack.c.l.b16 %v215
        %v292 = vunpack.c.h.b16 %v215
        %v293 = vunpack.c.l.b16 %v216
        %v294 = vunpack.c.h.b16 %v216
        %v295 = vunpack.c.l.b16 %v217
        %v296 = vunpack.c.h.b16 %v217
        %v297 = vunpack.c.l.b16 %v218
        %v298 = vunpack.c.h.b16 %v218
        %v299 = vunpack.c.l.b16 %v219
        %v300 = vunpack.c.h.b16 %v219
        %v301 = vunpack.c.l.b16 %v220
        %v302 = vunpack.c.h.b16 %v220
        %v303 = vunpack.c.l.b16 %v221
        %v304 = vunpack.c.h.b16 %v221
        %v305 = vunpack.c.l.b16 %v222
        %v306 = vunpack.c.h.b16 %v222
        %v307 = vunpack.c.l.b16 %v223
        %v308 = vunpack.c.h.b16 %v223
        %v309 = vunpack.c.l.b16 %v224
        %v310 = vunpack.c.h.b16 %v224
        %v311 = vunpack.c.l.b16 %v225
        %v312 = vunpack.c.h.b16 %v225
        %v313 = vunpack.c.l.b16 %v226
        %v314 = vunpack.c.h.b16 %v226
        %v315 = vunpack.c.l.b16 %v227
        %v316 = vunpack.c.h.b16 %v227
        %v317 = vunpack.c.l.b16 %v228
        %v318 = vunpack.c.h.b16 %v228
        %v319 = vunpack.c.l.b16 %v229
        %v320 = vunpack.c.h.b16 %v229
        %v321 = vunpack.c.l.b16 %v230
        %v322 = vunpack.c.h.b16 %v230
        %v323 = vunpack.c.l.b16 %v231
        %v324 = vunpack.c.h.b16 %v231
        %v325 = vunpack.c.l.b16 %v232
        %v326 = vunpack.c.h.b16 %v232
        %v327 = vunpack.c.l.b16 %v233
        %v328 = vunpack.c.h.b16 %v233
        %v329 = vunpack.c.l.b16 %v234
        %v330 = vunpack.c.h.b16 %v234
        %v331 = vpack.c.b16 %v269, %v267
        %v332 = vpack.c.b16 %v270, %v268
        %v333 = vpack.c.b16 %v273, %v271
        %v334 = vpack.c.b16 %v274, %v272
        %v335 = vpack.c.b16 %v277, %v275
        %v336 = vpack.c.b16 %v278, %v276
        %v337 = vpack.c.b16 %v281, %v279
        %v338 = vpack.c.b16 %v282, %v280
        %v339 = vpack.c.b16 %v285, %v283
        %v340 = vpack.c.b16 %v286, %v284
        %v341 = vpack.c.b16 %v289, %v287
        %v342 = vpack.c.b16 %v290, %v288
        %v343 = vpack.c.b16 %v293, %v291
        %v344 = vpack.c.b16 %v294, %v292
        %v345 = vpack.c.b16 %v297, %v295
        %v346 = vpack.c.b16 %v298, %v296
        %v347 = vpack.c.b16 %v301, %v299
        %v348 = vpack.c.b16 %v302, %v300
        %v349 = vpack.c.b16 %v305, %v303
        %v350 = vpack.c.b16 %v306, %v304
        %v351 = vpack.c.b16 %v309, %v307
        %v352 = vpack.c.b16 %v310, %v308
        %v353 = vpack.c.b16 %v313, %v311
        %v354 = vpack.c.b16 %v314, %v312
        %v355 = vpack.c.b16 %v317, %v315
        %v356 = vpack.c.b16 %v318, %v316
        %v357 = vpack.c.b16 %v321, %v319
        %v358 = vpack.c.b16 %v322, %v320
        %v359 = vpack.c.b16 %v325, %v323
        %v360 = vpack.c.b16 %v326, %v324
        %v361 = vpack.c.b16 %v329, %v327
        %v362 = vpack.c.b16 %v330, %v328
        %395 = vmatprep.subr.bf16.mxu0 %v346
        %396 = vmatpush1.bf16.msra.mxu0 %v345
        %397 = vmatprep.subr.bf16.mxu0 %v344
        %398 = vmatpush1.bf16.msra.mxu0 %v343
        %399 = vmatprep.subr.bf16.mxu0 %v342
        %400 = vmatpush1.bf16.msra.mxu0 %v341
        %401 = vmatprep.subr.bf16.mxu0 %v340
        %402 = vmatpush1.bf16.msra.mxu0 %v339
        %403 = vmatprep.subr.bf16.mxu0 %v338
        %404 = vmatpush1.bf16.msra.mxu0 %v337
        %405 = vmatprep.subr.bf16.mxu0 %v336
        %406 = vmatpush1.bf16.msra.mxu0 %v335
        %407 = vmatprep.subr.bf16.mxu0 %v334
        %408 = vmatpush1.bf16.msra.mxu0 %v333
        %409 = vmatprep.subr.bf16.mxu0 %v332
        %410 = vmatpush1.bf16.msra.mxu0 %v331
        %411 = vmatprep.subr.bf16.mxu0 %v362
        %412 = vmatpush2.bf16.msra.mxu0 %v361
        %413 = vmatprep.subr.bf16.mxu0 %v360
        %414 = vmatpush2.bf16.msra.mxu0 %v359
        %415 = vmatprep.subr.bf16.mxu0 %v358
        %416 = vmatpush2.bf16.msra.mxu0 %v357
        %417 = vmatprep.subr.bf16.mxu0 %v356
        %418 = vmatpush2.bf16.msra.mxu0 %v355
        %419 = vmatprep.subr.bf16.mxu0 %v354
        %420 = vmatpush2.bf16.msra.mxu0 %v353
        %421 = vmatprep.subr.bf16.mxu0 %v352
        %422 = vmatpush2.bf16.msra.mxu0 %v351
        %423 = vmatprep.subr.bf16.mxu0 %v350
        %424 = vmatpush2.bf16.msra.mxu0 %v349
        %425 = vmatprep.subr.bf16.mxu0 %v348
        %426 = vmatpush2.bf16.msra.mxu0 %v347
        %427 = vmatprep.mubr.bf16.mxu0 %v196
        %428 = vmatmul.mubr.bf16.gmra.mxu0 %v195
        %v429 = vpop.f32.mrf.mxu0
        %v430 = vadd.f32 0.0, %v429
        %v431 = vpop.f32.mrf.mxu0
        %v432 = vadd.f32 0.0, %v431
        %v433 = vpop.f32.mrf.mxu0
        %v434 = vpop.f32.mrf.mxu0
        %435 = vdwg.mxu0
        %436 = vmatprep.subr.bf16.mxu0 %v346
        %437 = vmatpush1.bf16.msra.mxu0 %v345
        %438 = vmatprep.subr.bf16.mxu0 %v344
        %439 = vmatpush1.bf16.msra.mxu0 %v343
        %440 = vmatprep.subr.bf16.mxu0 %v342
        %441 = vmatpush1.bf16.msra.mxu0 %v341
        %442 = vmatprep.subr.bf16.mxu0 %v340
        %443 = vmatpush1.bf16.msra.mxu0 %v339
        %444 = vmatprep.subr.bf16.mxu0 %v338
        %445 = vmatpush1.bf16.msra.mxu0 %v337
        %446 = vmatprep.subr.bf16.mxu0 %v336
        %447 = vmatpush1.bf16.msra.mxu0 %v335
        %448 = vmatprep.subr.bf16.mxu0 %v334
        %449 = vmatpush1.bf16.msra.mxu0 %v333
        %450 = vmatprep.subr.bf16.mxu0 %v332
        %451 = vmatpush1.bf16.msra.mxu0 %v331
        %452 = vmatprep.subr.bf16.mxu0 %v362
        %453 = vmatpush2.bf16.msra.mxu0 %v361
        %454 = vmatprep.subr.bf16.mxu0 %v360
        %455 = vmatpush2.bf16.msra.mxu0 %v359
        %456 = vmatprep.subr.bf16.mxu0 %v358
        %457 = vmatpush2.bf16.msra.mxu0 %v357
        %458 = vmatprep.subr.bf16.mxu0 %v356
        %459 = vmatpush2.bf16.msra.mxu0 %v355
        %460 = vmatprep.subr.bf16.mxu0 %v354
        %461 = vmatpush2.bf16.msra.mxu0 %v353
        %462 = vmatprep.subr.bf16.mxu0 %v352
        %463 = vmatpush2.bf16.msra.mxu0 %v351
        %464 = vmatprep.subr.bf16.mxu0 %v350
        %465 = vmatpush2.bf16.msra.mxu0 %v349
        %466 = vmatprep.subr.bf16.mxu0 %v348
        %467 = vmatpush2.bf16.msra.mxu0 %v347
        %468 = vmatprep.mubr.bf16.mxu0 %v190
        %469 = vmatmul.mubr.bf16.gmra.mxu0 %v189
        %v470 = vpop.f32.mrf.mxu0
        %v471 = vadd.f32 %v430, %v470
        %v472 = vpop.f32.mrf.mxu0
        %v473 = vadd.f32 %v432, %v472
        %v474 = vpop.f32.mrf.mxu0
        %v475 = vpop.f32.mrf.mxu0
        %476 = vdwg.mxu0
        %477 = vmatprep.subr.bf16.mxu0 %v346
        %478 = vmatpush1.bf16.msra.mxu0 %v345
        %479 = vmatprep.subr.bf16.mxu0 %v344
        %480 = vmatpush1.bf16.msra.mxu0 %v343
        %481 = vmatprep.subr.bf16.mxu0 %v342
        %482 = vmatpush1.bf16.msra.mxu0 %v341
        %483 = vmatprep.subr.bf16.mxu0 %v340
        %484 = vmatpush1.bf16.msra.mxu0 %v339
        %485 = vmatprep.subr.bf16.mxu0 %v338
        %486 = vmatpush1.bf16.msra.mxu0 %v337
        %487 = vmatprep.subr.bf16.mxu0 %v336
        %488 = vmatpush1.bf16.msra.mxu0 %v335
        %489 = vmatprep.subr.bf16.mxu0 %v334
        %490 = vmatpush1.bf16.msra.mxu0 %v333
        %491 = vmatprep.subr.bf16.mxu0 %v332
        %492 = vmatpush1.bf16.msra.mxu0 %v331
        %493 = vmatprep.subr.bf16.mxu0 %v362
        %494 = vmatpush2.bf16.msra.mxu0 %v361
        %495 = vmatprep.subr.bf16.mxu0 %v360
        %496 = vmatpush2.bf16.msra.mxu0 %v359
        %497 = vmatprep.subr.bf16.mxu0 %v358
        %498 = vmatpush2.bf16.msra.mxu0 %v357
        %499 = vmatprep.subr.bf16.mxu0 %v356
        %500 = vmatpush2.bf16.msra.mxu0 %v355
        %501 = vmatprep.subr.bf16.mxu0 %v354
        %502 = vmatpush2.bf16.msra.mxu0 %v353
        %503 = vmatprep.subr.bf16.mxu0 %v352
        %504 = vmatpush2.bf16.msra.mxu0 %v351
        %505 = vmatprep.subr.bf16.mxu0 %v350
        %506 = vmatpush2.bf16.msra.mxu0 %v349
        %507 = vmatprep.subr.bf16.mxu0 %v348
        %508 = vmatpush2.bf16.msra.mxu0 %v347
        %509 = vmatprep.mubr.bf16.mxu0 %v202
        %510 = vmatmul.mubr.bf16.gmra.mxu0 %v201
        %v511 = vpop.f32.mrf.mxu0
        %v512 = vadd.f32 0.0, %v511
        %v513 = vpop.f32.mrf.mxu0
        %v514 = vadd.f32 0.0, %v513
        %v515 = vpop.f32.mrf.mxu0
        %v516 = vpop.f32.mrf.mxu0
        %517 = vdwg.mxu0
        %v518 = vadd.f32 %v471, %v512
        %v519 = vadd.f32 %v473, %v514
        %v520 = vstv %s185
        %v521 = vsub.f32 %v518, %v520
        %v522 = vmul.f32 %v521, 1.7214206
        %v523 = vand.u32 2147483647, %v522
        %vm524 = vcmp.le.f32.partialorder %v523, 0.7853982
        %vm525 = vcmp.lt.s32.totalorder %v522, 0
        %v526 = vand.u32 %v522, 2139095040
        %v527 = vshrl.u32 %v526, 23
        %v528 = vsub.s32 %v527, 127
        %v529 = vand.u32 2147483647, %v522
        %v530 = vand.u32 %v529, 8388607
        %v531 = vor.u32 %v530, 8388608
        %v532 = vsub.s32 0, %v531
        %v533 = vadd.s32 %v528, 1
        %vm534 = vcmp.gt.s32.totalorder %v533, 0
        %v535 = vsel %vm534, %v533, 0
        %v536 = vshrl.u32 %v535, 5
        %v537 = vand.u32 %v535, 31
        %v538 = vsub.s32 32, %v537
        %v539 = vshrl.u32 683565275, %v538
        %v540 = vshll.u32 683565275, %v537
        %v541 = vshrl.u32 2475754826, %v538
        %v542 = vor.u32 %v540, %v541
        %v543 = vshll.u32 2475754826, %v537
        %v544 = vshrl.u32 2131351028, %v538
        %v545 = vor.u32 %v543, %v544
        %v546 = vshll.u32 2131351028, %v537
        %v547 = vshrl.u32 2102212464, %v538
        %v548 = vor.u32 %v546, %v547
        %v549 = vshll.u32 2102212464, %v537
        %v550 = vshrl.u32 920167782, %v538
        %v551 = vor.u32 %v549, %v550
        %v552 = vshll.u32 920167782, %v537
        %v553 = vshrl.u32 1326507024, %v538
        %v554 = vor.u32 %v552, %v553
        %vm555 = vcmp.lt.s32.totalorder %v536, 1
        %vm556 = vcmp.lt.s32.totalorder %v536, 2
        %vm557 = vcmp.lt.s32.totalorder %v536, 3
        %vm558 = vcmp.lt.s32.totalorder %v536, 4
        %v559 = vsel %vm555, %v539, %v542
        %v560 = vsel %vm558, %v548, 2102212464
        %v561 = vsel %vm557, %v545, %v560
        %v562 = vsel %vm556, %v559, %v561
        %v563 = vsel %vm555, %v542, %v545
        %v564 = vsel %vm558, %v551, 920167782
        %v565 = vsel %vm557, %v548, %v564
        %v566 = vsel %vm556, %v563, %v565
        %v567 = vsel %vm555, %v545, %v548
        %v568 = vsel %vm558, %v554, 1326507024
        %v569 = vsel %vm557, %v551, %v568
        %v570 = vsel %vm556, %v567, %v569
        %v571 = vshll.u32 %v531, 8
        %v572 = vmul.u32.u64.compose %v571, %v570
        %v573 = vextract.low.u32 %v572
        %v574 = vextract.high.u32 %v572
        %v575 = vmul.u32.u64.compose %v571, %v566
        %v576 = vextract.low.u32 %v575
        %v577 = vextract.high.u32 %v575
        %v578 = vmul.u32 %v571, %v562
        %v579 = vadd.s32 %v574, %v576
        %vm580 = vc.u32 %v574, %v576
        %v581 = vadd.s32 %v577, 1
        %v582 = vsel %vm580, %v581, %v577
        %v583 = vadd.s32 %v578, %v582
        %v584 = vadd.s32 %v583, 536870912
        %v585 = vshrl.u32 %v584, 30
        %v586 = vshll.u32 %v585, 30
        %v587 = vsub.s32 %v583, %v586
        %vm588 = vcmp.lt.s32.totalorder %v587, 0
        %v589 = vsub.s32 0, %v587
        %v590 = vsel %vm588, %v589, %v587
        %v591 = vclz %v590
        %v592 = vsub.s32 %v591, 2
        %vm593 = vcmp.gt.s32.totalorder 0, %v592
        %v594 = vsel %vm593, 0, %v592
        %v595 = vsub.s32 32, %v594
        %v596 = vshll.u32 %v587, %v594
        %v597 = vshrl.u32 %v579, %v595
        %v598 = vor.u32 %v596, %v597
        %v599 = vsub.s32 4294967266, %v594
        %v600 = vadd.s32 %v599, 127
        %v601 = vshll.u32 %v600, 23
        %v602 = vor.u32 4788187, %v601
        %v603 = vand.u32 2147483647, %v602
        %v605 = vcvt.s32.f32 %v598
        %v606 = vmul.f32 %v605, %v603
        %v607 = vxor.u32 %v606, 2147483648
        %v608 = vsel %vm525, %v607, %v606
        %v609 = vsub.s32 4, %v585
        %v610 = vsel %vm525, %v609, %v585
        %v611 = vsel %vm524, %v522, %v608
        %v612 = vsel %vm524, 0, %v610
        %v613 = vcosq.f32.pop %v611
        %v614 = vsinq.f32.pop %v611
        %vm615 = vweird.f32 %v522
        %v616 = vand.u32 %v612, 3
        %vm617 = vcmp.lt.s32.totalorder %v616, 2
        %vm618 = vcmp.eq.s32.totalorder %v616, 0
        %v619 = vxor.u32 %v614, 2147483648
        %v620 = vsel %vm618, %v613, %v619
        %vm621 = vcmp.eq.s32.totalorder %v616, 2
        %v622 = vxor.u32 %v613, 2147483648
        %v623 = vsel %vm621, %v622, %v614
        %v624 = vsel %vm617, %v620, %v623
        %v625 = vsel %vm615, nan, %v624
        %v626 = vstv %s184
        %v627 = vmul.f32 %v626, %v625
        %v628 = vstv %s183
        %v629 = vadd.f32 %v628, %v627
        %v630 = vstv %s186
        %v631 = vmul.f32 %v630, %v519
        %v632 = vadd.f32 %v629, %v631
        %633 = vst [vmem:[%s177] sm:$0xff] %v632
        %s634 = sand.u32 %s94, 1
        %s635 = scalar_lea.sflag [#allocation3], %s634
        %s636 = sand.u32 %s94, 1
        %s637 = smul.addr %s636, 8
        %s638 = scalar_lea.vmem [#allocation5], %s637
        // Predicated region
        $region37: #{cosnet_forward.1} parent=31 // pred_check
          %p639 = pneg %p104
        $region38: #{cosnet_forward.1} parent=31 // pred_check_branch
          %641 = sbr.rel (%p639) target = $region40
        $region39: #{cosnet_forward.1} parent=31 // pred_region
          %s643 = ssub.s32 128, 128
          %644 = vsyncadd %s635, %s643
          %s645 = smul.addr %s18, 128
          %s646 = scalar_lea.hbm %s3, %s645
          %s648 = sshll.u32 %s638, 4
          %s649 = int_to_ptr.vmem [resolvable:$true] %s648
          %651 = dma.vmem_to_hbm [thread:$0]  %s649, 128, %s646, %s635
        $region40: #{cosnet_forward.1} parent=31 // pred_fallthru
          _
      $region32: #{cosnet_forward.1} parent=5 // pred_fallthru
        _
      %p652 = scmp.le.s32.totalorder 2, %s13
      // Predicated region
      $region41: #{cosnet_forward.1} parent=5 // pred_check
        %p653 = pneg %p652
      $region42: #{cosnet_forward.1} parent=5 // pred_check_branch
        %655 = sbr.rel (%p653) target = $region44
      $region43: #{cosnet_forward.1} parent=5 // pred_region
        %s656 = ssub.s32 %s13, 2
        // Predicated region
        $region45: #{cosnet_forward.1} parent=43 // pred_check
          %p657 = pneg %p110
        $region46: #{cosnet_forward.1} parent=43 // pred_check_branch
          %659 = sbr.rel (%p657) target = $region48
        $region47: #{cosnet_forward.1} parent=43 // pred_region
          %s660 = sand.u32 %s95, 1
          %s661 = scalar_lea.sflag [#allocation3], %s660
          %s662 = sand.u32 %s95, 1
          %s663 = smul.addr %s662, 8
          %s664 = scalar_lea.vmem [#allocation5], %s663
          %665 = dma.done %s661, 128
        $region48: #{cosnet_forward.1} parent=43 // pred_fallthru
          _
      $region44: #{cosnet_forward.1} parent=5 // pred_fallthru
        _
    $region6: #{cosnet_forward.1} parent=1 // loop_footer
      %s17 = sadd.s32 1, %s13
    $region7: #{cosnet_forward.1} parent=1 // loop_footer_branch
      %12 = sbr.rel target = $region3
    $region8: #{cosnet_forward.1} parent=1 // loop_exit
      _
    %666 = vsyncpa [#allocation3], 1
    %s667 = scalar_lea.sflag [#allocation3], 1
    %668 = vsyncpa %s667, 1
    %669 = vsyncpa [#allocation4], 1
    %s670 = scalar_lea.sflag [#allocation4], 1
    %671 = vsyncpa %s670, 1

</llo_original>
